<compile_context>
chip_gen: v5e
topology: v5e:2x2
jax: 0.10.0
libtpu: 0.0.40
codegen_flags: <defaults>
</compile_context>

<pallas_src>
import jax
import jax.numpy as jnp
from jax.experimental import pallas as pl
from jax.experimental.pallas import tpu as pltpu

# ----------------------------- model hyper-params ---------------------------------
B = 2                 # batch
NCAM = 2              # cameras
IMG_C, IMG_H, IMG_W = 3, 16, 16
QPOS_DIM = 8
ACTION_DIM = 8
HORIZON = 8           # chunk_size / model.horizon
FULL_SEQ = 10         # raw action sequence length (>= horizon, sliced in forward)
CONV_OUT = 16
IMG_FEAT = 32
QPOS_FEAT = 32
TIME_EMB_DIM = 32
HIDDEN = 64
GLOBAL_COND = NCAM * IMG_FEAT + QPOS_FEAT          # 96
COND_DIM = TIME_EMB_DIM + GLOBAL_COND              # 128
NUM_TRAIN_TIMESTEPS = 16

KCONV, STRIDE, PADCONV = 3, 2, 1
HO = (IMG_H + 2 * PADCONV - KCONV) // STRIDE + 1   # 8
WO = (IMG_W + 2 * PADCONV - KCONV) // STRIDE + 1   # 8
BN = B * NCAM                                      # 4
BT = B * HORIZON                                   # 16

_VMEM = pl.BlockSpec(memory_space=pltpu.MemorySpace.VMEM)
_SMEM = pl.BlockSpec(memory_space=pltpu.MemorySpace.SMEM)

N_ENC = 17            # number of leading refs shared by both kernels (obs encoder)


def _dot(a, b):
    return jnp.dot(a, b, preferred_element_type=jnp.float32)


# ----------------------------- shared in-kernel obs encoder -------------------------
def _gcond_from_refs(enc_refs):
    """conv(im2col matmul)+relu -> matmul mean-pool -> img/qpos MLP -> FiLM cond terms.

    Returns the FiLM scale/shift contributions of the global condition, (B, HIDDEN) each.
    The cond weights are pre-split per source (cam0/cam1/qpos), so no concat is needed.
    """
    (col_ref, pool_ref, conv_wt_ref, conv_b_ref, img_w_ref, img_b_ref,
     qpos_ref, qpos_w_ref, qpos_b_ref,
     wsg_c0_ref, wsg_c1_ref, wsg_q_ref, bs_ref,
     whg_c0_ref, whg_c1_ref, whg_q_ref, bh_ref) = enc_refs

    feat = jnp.maximum(_dot(col_ref[...], conv_wt_ref[...]) + conv_b_ref[...], 0.0)  # (BN*HO*WO, CONV_OUT)
    pooled = _dot(pool_ref[...], feat)                                               # (BN, CONV_OUT)
    img_feat = jnp.maximum(_dot(pooled, img_w_ref[...]) + img_b_ref[...], 0.0)       # (BN, IMG_FEAT), cam-major
    qpos_feat = jnp.maximum(_dot(qpos_ref[...], qpos_w_ref[...]) + qpos_b_ref[...], 0.0)  # (B, QPOS_FEAT)

    f_c0 = img_feat[0:B]          # camera 0 features for batches 0..B-1 (cam-major rows)
    f_c1 = img_feat[B:2 * B]      # camera 1 features
    gscale = (_dot(f_c0, wsg_c0_ref[...]) + _dot(f_c1, wsg_c1_ref[...])
              + _dot(qpos_feat, wsg_q_ref[...]) + bs_ref[...])                        # (B, HIDDEN)
    gshift = (_dot(f_c0, whg_c0_ref[...]) + _dot(f_c1, whg_c1_ref[...])
              + _dot(qpos_feat, whg_q_ref[...]) + bh_ref[...])
    return gscale, gshift


# ----------------------------- fused training kernel --------------------------------
def _train_kernel(*refs):
    enc_refs = refs[:N_ENC]
    (exp_ref, toh_ref, tsc_tab_ref, tsh_tab_ref,
     act_ref, noise_ref, sa_ref, sm_ref, mask_ref,
     w1_ref, b1_ref, w2_ref, b2_ref, out_ref) = refs[N_ENC:]

    gscale, gshift = _gcond_from_refs(enc_refs)                       # (B, HIDDEN)

    # time contribution via one-hot matmul (time MLP + FiLM projection pre-folded at init)
    scale_b = gscale + _dot(toh_ref[...], tsc_tab_ref[...])           # (B, HIDDEN)
    shift_b = gshift + _dot(toh_ref[...], tsh_tab_ref[...])
    # expand per-batch rows to per-(batch, t) rows with a constant (B*T, B) matrix
    scale = _dot(exp_ref[...], scale_b)                               # (B*T, HIDDEN)
    shift = _dot(exp_ref[...], shift_b)

    noise = noise_ref[...]
    noisy = sa_ref[...] * act_ref[...] + sm_ref[...] * noise          # DDPM add_noise, (B*T, A)

    h = jnp.maximum(_dot(noisy, w1_ref[...]) + b1_ref[...], 0.0)      # (B*T, HIDDEN)
    h = h * (1.0 + scale) + shift                                     # FiLM
    pred = _dot(h, w2_ref[...]) + b2_ref[...]                         # (B*T, A)

    d = pred - noise
    # (raw_loss * ~is_pad).mean()  ==  sum(d^2 * mask) / (B*T*A)
    out_ref[0, 0] = jnp.sum(d * d * mask_ref[...]) * (1.0 / float(B * HORIZON * ACTION_DIM))


# ----------------------------- fused DDPM sampling kernel ----------------------------
def _sample_kernel(*refs):
    enc_refs = refs[:N_ENC]
    (exp_ref, tsc_tab_ref, tsh_tab_ref, x0_ref,
     w1_ref, b1_ref, w2_ref, b2_ref,
     s1m_ref, isa_ref, c1_ref, c2_ref, out_ref) = refs[N_ENC:]

    gscale, gshift = _gcond_from_refs(enc_refs)                       # (B, HIDDEN)
    # global-cond FiLM contribution is constant across timesteps: hoist out of the loop
    gsc = _dot(exp_ref[...], gscale)                                  # (B*T, HIDDEN)
    gsh = _dot(exp_ref[...], gshift)

    tsc_tab = tsc_tab_ref[...]                                        # (NUM_T, HIDDEN)
    tsh_tab = tsh_tab_ref[...]
    w1 = w1_ref[...]; b1 = b1_ref[...]; w2 = w2_ref[...]; b2 = b2_ref[...]

    x = x0_ref[...]                                                   # (B*T, A)
    # statically-unrolled reverse loop: all table slices / SMEM coefficient reads are at
    # static indices, and the scale/shift adds are x-independent (hoistable by scheduler).
    for i in range(NUM_TRAIN_TIMESTEPS):
        ti = NUM_TRAIN_TIMESTEPS - 1 - i
        scale = tsc_tab[ti:ti + 1, :] + gsc                           # (B*T, HIDDEN)
        shift = tsh_tab[ti:ti + 1, :] + gsh
        h = jnp.maximum(_dot(x, w1) + b1, 0.0)
        h = h * (1.0 + scale) + shift
        eps = _dot(h, w2) + b2                                        # (B*T, A)
        # scheduler coefficients (precomputed tables, SMEM scalar reads at static index)
        x0p = jnp.clip((x - s1m_ref[ti] * eps) * isa_ref[ti], -1.0, 1.0)
        x = c1_ref[ti] * x0p + c2_ref[ti] * x
    out_ref[...] = x
    # TODO(synk): DDPM posterior-variance noise term (sigma_t * z for t > 0) omitted, so
    # this behaves like a deterministic sampler (same as the previous version).


# ----------------------------- im2col (glue, NCHW conv) -----------------------------
def im2col_nchw(x, k=KCONV, stride=STRIDE, pad=PADCONV):
    Bn, C, H, W = x.shape
    xp = jnp.pad(x, ((0, 0), (0, 0), (pad, pad), (pad, pad)))
    Ho = (H + 2 * pad - k) // stride + 1
    Wo = (W + 2 * pad - k) // stride + 1
    cols = []
    for di in range(k):
        for dj in range(k):
            cols.append(xp[:, :, di:di + stride * Ho:stride, dj:dj + stride * Wo:stride])
    col = jnp.stack(cols, axis=2)                 # (Bn, C, k*k, Ho, Wo)  -> (Cin,kh,kw) order
    return col.reshape(Bn, C * k * k, Ho, Wo), Ho, Wo


def _encode_args(params, image, qpos):
    # image: (B, ncam, C, H, W) NCHW (PyTorch layout); flatten cam-major so per-camera
    # feature rows are contiguous blocks -> concat-free FiLM inside the kernel.
    x = image.astype(jnp.float32).transpose(1, 0, 2, 3, 4).reshape(NCAM * B, IMG_C, IMG_H, IMG_W)
    col, _, _ = im2col_nchw(x)
    col = col.transpose(0, 2, 3, 1).reshape(NCAM * B * HO * WO, IMG_C * KCONV * KCONV)
    return (col, params["pool_mat"], params["conv_wt"], params["conv_b"],
            params["img_w"], params["img_b"], qpos.astype(jnp.float32),
            params["qpos_w"], params["qpos_b"],
            params["wsg_c0"], params["wsg_c1"], params["wsg_q"], params["film_bs"],
            params["whg_c0"], params["whg_c1"], params["whg_q"], params["film_bh"])


# ----------------------------- DiffusionPolicy.forward ------------------------------
@jax.jit
def train_forward(params, image, qpos, actions, is_pad, rng):
    actions = actions[:, :HORIZON].astype(jnp.float32)
    is_pad = is_pad[:, :HORIZON]

    k_t, k_n = jax.random.split(rng)
    t = jax.random.randint(k_t, (B,), 0, NUM_TRAIN_TIMESTEPS).astype(jnp.int32)
    noise = jax.random.normal(k_n, (B, HORIZON, ACTION_DIM), dtype=jnp.float32)

    # tiny per-batch scalars expanded to (B*T, 1) rows (16 floats each; not a real broadcast)
    sa_row = jnp.repeat(params["sqrt_acp"][t], HORIZON)[:, None]
    sm_row = jnp.repeat(params["sqrt_1macp"][t], HORIZON)[:, None]
    t_onehot = (t[:, None] == jnp.arange(NUM_TRAIN_TIMESTEPS)[None, :]).astype(jnp.float32)
    mask = (~is_pad).astype(jnp.float32).reshape(BT, 1)

    args = _encode_args(params, image, qpos) + (
        params["exp_mat"], t_onehot, params["tscale_tab"], params["tshift_tab"],
        actions.reshape(BT, ACTION_DIM), noise.reshape(BT, ACTION_DIM),
        sa_row, sm_row, mask,
        params["film_w1"], params["film_b1"], params["film_w2"], params["film_b2"])

    loss = pl.pallas_call(
        _train_kernel,
        out_shape=jax.ShapeDtypeStruct((1, 1), jnp.float32),
        in_specs=[_VMEM] * len(args),
        out_specs=_SMEM,
    )(*args)
    return {"loss": loss[0, 0]}


@jax.jit
def infer_forward(params, image, qpos, rng):
    x0 = jax.random.normal(rng, (B, HORIZON, ACTION_DIM), dtype=jnp.float32)

    vmem_args = _encode_args(params, image, qpos) + (
        params["exp_mat"], params["tscale_tab"], params["tshift_tab"],
        x0.reshape(BT, ACTION_DIM),
        params["film_w1"], params["film_b1"], params["film_w2"], params["film_b2"])
    smem_args = (params["sqrt_1macp"], params["inv_sqrt_acp"],
                 params["post_c1"], params["post_c2"])

    action = pl.pallas_call(
        _sample_kernel,
        out_shape=jax.ShapeDtypeStruct((BT, ACTION_DIM), jnp.float32),
        in_specs=[_VMEM] * len(vmem_args) + [_SMEM] * len(smem_args),
        out_specs=_VMEM,
    )(*vmem_args, *smem_args)
    # TODO(synk): LinearNormalizer un-normalization of action_pred omitted (no dataset stats).
    return action.reshape(B, HORIZON, ACTION_DIM)


def diffusion_policy_forward(params, data, rng):
    image, qpos, actions, is_pad, task_emb = data   # task_emb unused (as in the module)
    if actions is not None:
        return train_forward(params, image, qpos, actions, is_pad, rng)
    return infer_forward(params, image, qpos, rng)


# ----------------------------- deterministic parameter init -------------------------
def init_params():
    keys = jax.random.split(jax.random.PRNGKey(42), 16)

    def w(k, shape, scale=0.05):
        return scale * jax.random.normal(k, shape, dtype=jnp.float32)

    conv_w = w(keys[0], (CONV_OUT, IMG_C, KCONV, KCONV))
    img_w = w(keys[1], (CONV_OUT, IMG_FEAT))
    qpos_w = w(keys[2], (QPOS_DIM, QPOS_FEAT))
    time_w = w(keys[3], (TIME_EMB_DIM, TIME_EMB_DIM))
    film_ws = w(keys[5], (COND_DIM, HIDDEN))
    film_wh = w(keys[6], (COND_DIM, HIDDEN))

    p = {
        # weights, preprocessed ONCE (reshape / transpose / split; nothing per-call)
        "conv_wt": conv_w.reshape(CONV_OUT, -1).T,          # (Cin*kh*kw, Cout)
        "conv_b": jnp.zeros((1, CONV_OUT), jnp.float32),
        "img_w": img_w, "img_b": jnp.zeros((1, IMG_FEAT), jnp.float32),
        "qpos_w": qpos_w, "qpos_b": jnp.zeros((1, QPOS_FEAT), jnp.float32),
        "film_w1": w(keys[4], (ACTION_DIM, HIDDEN)),
        "film_b1": jnp.zeros((1, HIDDEN), jnp.float32),
        "film_w2": w(keys[7], (HIDDEN, ACTION_DIM)),
        "film_b2": jnp.zeros((1, ACTION_DIM), jnp.float32),
        "film_bs": jnp.zeros((1, HIDDEN), jnp.float32),
        "film_bh": jnp.zeros((1, HIDDEN), jnp.float32),
        # FiLM cond weights split per source (cam0 / cam1 / qpos) -> no concat anywhere
        "wsg_c0": film_ws[TIME_EMB_DIM:TIME_EMB_DIM + IMG_FEAT],
        "wsg_c1": film_ws[TIME_EMB_DIM + IMG_FEAT:TIME_EMB_DIM + 2 * IMG_FEAT],
        "wsg_q": film_ws[TIME_EMB_DIM + 2 * IMG_FEAT:],
        "whg_c0": film_wh[TIME_EMB_DIM:TIME_EMB_DIM + IMG_FEAT],
        "whg_c1": film_wh[TIME_EMB_DIM + IMG_FEAT:TIME_EMB_DIM + 2 * IMG_FEAT],
        "whg_q": film_wh[TIME_EMB_DIM + 2 * IMG_FEAT:],
    }

    # constant mean-pool matrix over Ho*Wo spatial positions (matmul-pool inside kernel)
    howo = HO * WO
    rows = jnp.arange(BN)[:, None]
    cols = jnp.arange(BN * howo)[None, :] // howo
    p["pool_mat"] = (rows == cols).astype(jnp.float32) / float(howo)   # (BN, BN*Ho*Wo)

    # constant per-batch -> per-(batch,t) row-expansion matrix
    p["exp_mat"] = (jnp.arange(BT)[:, None] // HORIZON
                    == jnp.arange(B)[None, :]).astype(jnp.float32)     # (B*T, B)

    # sinusoidal timestep embedding -> time MLP -> FiLM time projections, all constant
    # w.r.t. data, folded once into (NUM_T, HIDDEN) tables (forward-only constant fold).
    half = TIME_EMB_DIM // 2
    freqs = jnp.exp(-jnp.log(10000.0) * jnp.arange(half, dtype=jnp.float32) / half)
    ang = jnp.arange(NUM_TRAIN_TIMESTEPS, dtype=jnp.float32)[:, None] * freqs[None, :]
    temb_table = jnp.concatenate([jnp.sin(ang), jnp.cos(ang)], axis=-1)    # (NUM_T, TIME_EMB)
    tfeat_tab = jnp.maximum(temb_table @ time_w, 0.0)                      # time MLP (bias = 0)
    p["tscale_tab"] = tfeat_tab @ film_ws[:TIME_EMB_DIM]                   # (NUM_T, HIDDEN)
    p["tshift_tab"] = tfeat_tab @ film_wh[:TIME_EMB_DIM]

    # DDPM scheduler tables (all per-timestep scalars precomputed)
    betas = jnp.linspace(1e-4, 2e-2, NUM_TRAIN_TIMESTEPS).astype(jnp.float32)
    alphas = 1.0 - betas
    acp = jnp.cumprod(alphas)
    acp_prev = jnp.concatenate([jnp.ones((1,), jnp.float32), acp[:-1]])
    p["sqrt_acp"] = jnp.sqrt(acp)
    p["sqrt_1macp"] = jnp.sqrt(1.0 - acp)
    p["inv_sqrt_acp"] = 1.0 / jnp.sqrt(acp)
    p["post_c1"] = jnp.sqrt(acp_prev) * betas / (1.0 - acp)
    p["post_c2"] = jnp.sqrt(alphas) * (1.0 - acp_prev) / (1.0 - acp)
    return p
    # TODO(synk): optimizer / hydra config / ResNet18-UNet1D architecture not reproducible
    # without the original cfg + checkpoint; replaced by the simplified nets above.


# ----------------------------- driver ----------------------------------------------
if __name__ == "__main__":
    params = init_params()

    key = jax.random.PRNGKey(0)
    k_img, k_qpos, k_act, k_fwd = jax.random.split(key, 4)
    image = jax.random.normal(k_img, (B, NCAM, IMG_C, IMG_H, IMG_W), dtype=jnp.float32)
    qpos = jax.random.normal(k_qpos, (B, QPOS_DIM), dtype=jnp.float32)
    actions = jax.random.normal(k_act, (B, FULL_SEQ, ACTION_DIM), dtype=jnp.float32)
    is_pad = jnp.arange(FULL_SEQ)[None, :] >= jnp.array([[8], [6]])   # (B, FULL_SEQ) bool
    task_emb = jnp.zeros((B, 16), jnp.float32)

    # training branch (actions provided) -> loss dict
    loss_dict = diffusion_policy_forward(params, (image, qpos, actions, is_pad, task_emb), k_fwd)
    loss = jax.block_until_ready(loss_dict["loss"])
    assert jnp.isfinite(loss), "loss is not finite"

    # inference branch (actions is None) -> action_pred
    action_pred = diffusion_policy_forward(params, (image, qpos, None, None, task_emb), k_fwd)
    action_pred = jax.block_until_ready(action_pred)
    assert action_pred.shape == (B, HORIZON, ACTION_DIM)
    assert bool(jnp.all(jnp.isfinite(action_pred)))

    print("KERNEL_OK")
</pallas_src>

<mosaic_0001>
module attributes {stable_mosaic.version = 11 : i64} {
  func.func @_train_kernel(%arg0: memref<256x27xf32, #tpu.memory_space<vmem>>, %arg1: memref<4x256xf32, #tpu.memory_space<vmem>>, %arg2: memref<27x16xf32, #tpu.memory_space<vmem>>, %arg3: memref<1x16xf32, #tpu.memory_space<vmem>>, %arg4: memref<16x32xf32, #tpu.memory_space<vmem>>, %arg5: memref<1x32xf32, #tpu.memory_space<vmem>>, %arg6: memref<2x8xf32, #tpu.memory_space<vmem>>, %arg7: memref<8x32xf32, #tpu.memory_space<vmem>>, %arg8: memref<1x32xf32, #tpu.memory_space<vmem>>, %arg9: memref<32x64xf32, #tpu.memory_space<vmem>>, %arg10: memref<32x64xf32, #tpu.memory_space<vmem>>, %arg11: memref<32x64xf32, #tpu.memory_space<vmem>>, %arg12: memref<1x64xf32, #tpu.memory_space<vmem>>, %arg13: memref<32x64xf32, #tpu.memory_space<vmem>>, %arg14: memref<32x64xf32, #tpu.memory_space<vmem>>, %arg15: memref<32x64xf32, #tpu.memory_space<vmem>>, %arg16: memref<1x64xf32, #tpu.memory_space<vmem>>, %arg17: memref<16x2xf32, #tpu.memory_space<vmem>>, %arg18: memref<2x16xf32, #tpu.memory_space<vmem>>, %arg19: memref<16x64xf32, #tpu.memory_space<vmem>>, %arg20: memref<16x64xf32, #tpu.memory_space<vmem>>, %arg21: memref<16x8xf32, #tpu.memory_space<vmem>>, %arg22: memref<16x8xf32, #tpu.memory_space<vmem>>, %arg23: memref<16x1xf32, #tpu.memory_space<vmem>>, %arg24: memref<16x1xf32, #tpu.memory_space<vmem>>, %arg25: memref<16x1xf32, #tpu.memory_space<vmem>>, %arg26: memref<8x64xf32, #tpu.memory_space<vmem>>, %arg27: memref<1x64xf32, #tpu.memory_space<vmem>>, %arg28: memref<64x8xf32, #tpu.memory_space<vmem>>, %arg29: memref<1x8xf32, #tpu.memory_space<vmem>>, %arg30: memref<1x1xf32, #tpu.memory_space<smem>>) attributes {dimension_semantics = [], scalar_prefetch = 0 : i64, scratch_operands = 0 : i64, tpu.core_type = #tpu.core_type<tc>} {
    %c0 = arith.constant 0 : index
    %c0_0 = arith.constant 0 : index
    %0 = vector.load %arg0[%c0, %c0_0] : memref<256x27xf32, #tpu.memory_space<vmem>>, vector<256x27xf32>
    %c0_1 = arith.constant 0 : index
    %c0_2 = arith.constant 0 : index
    %1 = vector.load %arg2[%c0_1, %c0_2] : memref<27x16xf32, #tpu.memory_space<vmem>>, vector<27x16xf32>
    %cst = arith.constant dense<0.000000e+00> : vector<256x16xf32>
    %2 = tpu.matmul %0, %1, %cst {dimension_numbers = #tpu.dot_dimension_numbers<[1], [0], [0], [1], [0, 0, 1, 1], [], []>} : vector<256x27xf32>, vector<27x16xf32>, vector<256x16xf32> -> vector<256x16xf32>
    %c0_3 = arith.constant 0 : index
    %c0_4 = arith.constant 0 : index
    %3 = vector.load %arg3[%c0_3, %c0_4] : memref<1x16xf32, #tpu.memory_space<vmem>>, vector<1x16xf32>
    %4 = vector.broadcast %3 : vector<1x16xf32> to vector<256x16xf32>
    %5 = arith.addf %2, %4 : vector<256x16xf32>
    %cst_5 = arith.constant 0.000000e+00 : f32
    %6 = vector.broadcast %cst_5 : f32 to vector<256x16xf32>
    %7 = arith.maximumf %5, %6 : vector<256x16xf32>
    %c0_6 = arith.constant 0 : index
    %c0_7 = arith.constant 0 : index
    %8 = vector.load %arg1[%c0_6, %c0_7] : memref<4x256xf32, #tpu.memory_space<vmem>>, vector<4x256xf32>
    %cst_8 = arith.constant dense<0.000000e+00> : vector<4x16xf32>
    %9 = tpu.matmul %8, %7, %cst_8 {dimension_numbers = #tpu.dot_dimension_numbers<[1], [0], [0], [1], [0, 0, 1, 1], [], []>} : vector<4x256xf32>, vector<256x16xf32>, vector<4x16xf32> -> vector<4x16xf32>
    %c0_9 = arith.constant 0 : index
    %c0_10 = arith.constant 0 : index
    %10 = vector.load %arg4[%c0_9, %c0_10] : memref<16x32xf32, #tpu.memory_space<vmem>>, vector<16x32xf32>
    %cst_11 = arith.constant dense<0.000000e+00> : vector<4x32xf32>
    %11 = tpu.matmul %9, %10, %cst_11 {dimension_numbers = #tpu.dot_dimension_numbers<[1], [0], [0], [1], [0, 0, 1, 1], [], []>} : vector<4x16xf32>, vector<16x32xf32>, vector<4x32xf32> -> vector<4x32xf32>
    %c0_12 = arith.constant 0 : index
    %c0_13 = arith.constant 0 : index
    %12 = vector.load %arg5[%c0_12, %c0_13] : memref<1x32xf32, #tpu.memory_space<vmem>>, vector<1x32xf32>
    %13 = vector.broadcast %12 : vector<1x32xf32> to vector<4x32xf32>
    %14 = arith.addf %11, %13 : vector<4x32xf32>
    %cst_14 = arith.constant 0.000000e+00 : f32
    %15 = vector.broadcast %cst_14 : f32 to vector<4x32xf32>
    %16 = arith.maximumf %14, %15 : vector<4x32xf32>
    %c0_15 = arith.constant 0 : index
    %c0_16 = arith.constant 0 : index
    %17 = vector.load %arg6[%c0_15, %c0_16] : memref<2x8xf32, #tpu.memory_space<vmem>>, vector<2x8xf32>
    %c0_17 = arith.constant 0 : index
    %c0_18 = arith.constant 0 : index
    %18 = vector.load %arg7[%c0_17, %c0_18] : memref<8x32xf32, #tpu.memory_space<vmem>>, vector<8x32xf32>
    %cst_19 = arith.constant dense<0.000000e+00> : vector<2x32xf32>
    %19 = tpu.matmul %17, %18, %cst_19 {dimension_numbers = #tpu.dot_dimension_numbers<[1], [0], [0], [1], [0, 0, 1, 1], [], []>} : vector<2x8xf32>, vector<8x32xf32>, vector<2x32xf32> -> vector<2x32xf32>
    %c0_20 = arith.constant 0 : index
    %c0_21 = arith.constant 0 : index
    %20 = vector.load %arg8[%c0_20, %c0_21] : memref<1x32xf32, #tpu.memory_space<vmem>>, vector<1x32xf32>
    %21 = vector.broadcast %20 : vector<1x32xf32> to vector<2x32xf32>
    %22 = arith.addf %19, %21 : vector<2x32xf32>
    %cst_22 = arith.constant 0.000000e+00 : f32
    %23 = vector.broadcast %cst_22 : f32 to vector<2x32xf32>
    %24 = arith.maximumf %22, %23 : vector<2x32xf32>
    %25 = vector.extract_strided_slice %16 {offsets = [0, 0], sizes = [2, 32], strides = [1, 1]} : vector<4x32xf32> to vector<2x32xf32>
    %26 = vector.extract_strided_slice %16 {offsets = [2, 0], sizes = [2, 32], strides = [1, 1]} : vector<4x32xf32> to vector<2x32xf32>
    %c0_23 = arith.constant 0 : index
    %c0_24 = arith.constant 0 : index
    %27 = vector.load %arg9[%c0_23, %c0_24] : memref<32x64xf32, #tpu.memory_space<vmem>>, vector<32x64xf32>
    %cst_25 = arith.constant dense<0.000000e+00> : vector<2x64xf32>
    %28 = tpu.matmul %25, %27, %cst_25 {dimension_numbers = #tpu.dot_dimension_numbers<[1], [0], [0], [1], [0, 0, 1, 1], [], []>} : vector<2x32xf32>, vector<32x64xf32>, vector<2x64xf32> -> vector<2x64xf32>
    %c0_26 = arith.constant 0 : index
    %c0_27 = arith.constant 0 : index
    %29 = vector.load %arg10[%c0_26, %c0_27] : memref<32x64xf32, #tpu.memory_space<vmem>>, vector<32x64xf32>
    %cst_28 = arith.constant dense<0.000000e+00> : vector<2x64xf32>
    %30 = tpu.matmul %26, %29, %cst_28 {dimension_numbers = #tpu.dot_dimension_numbers<[1], [0], [0], [1], [0, 0, 1, 1], [], []>} : vector<2x32xf32>, vector<32x64xf32>, vector<2x64xf32> -> vector<2x64xf32>
    %31 = arith.addf %28, %30 : vector<2x64xf32>
    %c0_29 = arith.constant 0 : index
    %c0_30 = arith.constant 0 : index
    %32 = vector.load %arg11[%c0_29, %c0_30] : memref<32x64xf32, #tpu.memory_space<vmem>>, vector<32x64xf32>
    %cst_31 = arith.constant dense<0.000000e+00> : vector<2x64xf32>
    %33 = tpu.matmul %24, %32, %cst_31 {dimension_numbers = #tpu.dot_dimension_numbers<[1], [0], [0], [1], [0, 0, 1, 1], [], []>} : vector<2x32xf32>, vector<32x64xf32>, vector<2x64xf32> -> vector<2x64xf32>
    %34 = arith.addf %31, %33 : vector<2x64xf32>
    %c0_32 = arith.constant 0 : index
    %c0_33 = arith.constant 0 : index
    %35 = vector.load %arg12[%c0_32, %c0_33] : memref<1x64xf32, #tpu.memory_space<vmem>>, vector<1x64xf32>
    %36 = vector.broadcast %35 : vector<1x64xf32> to vector<2x64xf32>
    %37 = arith.addf %34, %36 : vector<2x64xf32>
    %c0_34 = arith.constant 0 : index
    %c0_35 = arith.constant 0 : index
    %38 = vector.load %arg13[%c0_34, %c0_35] : memref<32x64xf32, #tpu.memory_space<vmem>>, vector<32x64xf32>
    %cst_36 = arith.constant dense<0.000000e+00> : vector<2x64xf32>
    %39 = tpu.matmul %25, %38, %cst_36 {dimension_numbers = #tpu.dot_dimension_numbers<[1], [0], [0], [1], [0, 0, 1, 1], [], []>} : vector<2x32xf32>, vector<32x64xf32>, vector<2x64xf32> -> vector<2x64xf32>
    %c0_37 = arith.constant 0 : index
    %c0_38 = arith.constant 0 : index
    %40 = vector.load %arg14[%c0_37, %c0_38] : memref<32x64xf32, #tpu.memory_space<vmem>>, vector<32x64xf32>
    %cst_39 = arith.constant dense<0.000000e+00> : vector<2x64xf32>
    %41 = tpu.matmul %26, %40, %cst_39 {dimension_numbers = #tpu.dot_dimension_numbers<[1], [0], [0], [1], [0, 0, 1, 1], [], []>} : vector<2x32xf32>, vector<32x64xf32>, vector<2x64xf32> -> vector<2x64xf32>
    %42 = arith.addf %39, %41 : vector<2x64xf32>
    %c0_40 = arith.constant 0 : index
    %c0_41 = arith.constant 0 : index
    %43 = vector.load %arg15[%c0_40, %c0_41] : memref<32x64xf32, #tpu.memory_space<vmem>>, vector<32x64xf32>
    %cst_42 = arith.constant dense<0.000000e+00> : vector<2x64xf32>
    %44 = tpu.matmul %24, %43, %cst_42 {dimension_numbers = #tpu.dot_dimension_numbers<[1], [0], [0], [1], [0, 0, 1, 1], [], []>} : vector<2x32xf32>, vector<32x64xf32>, vector<2x64xf32> -> vector<2x64xf32>
    %45 = arith.addf %42, %44 : vector<2x64xf32>
    %c0_43 = arith.constant 0 : index
    %c0_44 = arith.constant 0 : index
    %46 = vector.load %arg16[%c0_43, %c0_44] : memref<1x64xf32, #tpu.memory_space<vmem>>, vector<1x64xf32>
    %47 = vector.broadcast %46 : vector<1x64xf32> to vector<2x64xf32>
    %48 = arith.addf %45, %47 : vector<2x64xf32>
    %c0_45 = arith.constant 0 : index
    %c0_46 = arith.constant 0 : index
    %49 = vector.load %arg18[%c0_45, %c0_46] : memref<2x16xf32, #tpu.memory_space<vmem>>, vector<2x16xf32>
    %c0_47 = arith.constant 0 : index
    %c0_48 = arith.constant 0 : index
    %50 = vector.load %arg19[%c0_47, %c0_48] : memref<16x64xf32, #tpu.memory_space<vmem>>, vector<16x64xf32>
    %cst_49 = arith.constant dense<0.000000e+00> : vector<2x64xf32>
    %51 = tpu.matmul %49, %50, %cst_49 {dimension_numbers = #tpu.dot_dimension_numbers<[1], [0], [0], [1], [0, 0, 1, 1], [], []>} : vector<2x16xf32>, vector<16x64xf32>, vector<2x64xf32> -> vector<2x64xf32>
    %52 = arith.addf %37, %51 : vector<2x64xf32>
    %c0_50 = arith.constant 0 : index
    %c0_51 = arith.constant 0 : index
    %53 = vector.load %arg18[%c0_50, %c0_51] : memref<2x16xf32, #tpu.memory_space<vmem>>, vector<2x16xf32>
    %c0_52 = arith.constant 0 : index
    %c0_53 = arith.constant 0 : index
    %54 = vector.load %arg20[%c0_52, %c0_53] : memref<16x64xf32, #tpu.memory_space<vmem>>, vector<16x64xf32>
    %cst_54 = arith.constant dense<0.000000e+00> : vector<2x64xf32>
    %55 = tpu.matmul %53, %54, %cst_54 {dimension_numbers = #tpu.dot_dimension_numbers<[1], [0], [0], [1], [0, 0, 1, 1], [], []>} : vector<2x16xf32>, vector<16x64xf32>, vector<2x64xf32> -> vector<2x64xf32>
    %56 = arith.addf %48, %55 : vector<2x64xf32>
    %c0_55 = arith.constant 0 : index
    %c0_56 = arith.constant 0 : index
    %57 = vector.load %arg17[%c0_55, %c0_56] : memref<16x2xf32, #tpu.memory_space<vmem>>, vector<16x2xf32>
    %cst_57 = arith.constant dense<0.000000e+00> : vector<16x64xf32>
    %58 = tpu.matmul %57, %52, %cst_57 {dimension_numbers = #tpu.dot_dimension_numbers<[1], [0], [0], [1], [0, 0, 1, 1], [], []>} : vector<16x2xf32>, vector<2x64xf32>, vector<16x64xf32> -> vector<16x64xf32>
    %c0_58 = arith.constant 0 : index
    %c0_59 = arith.constant 0 : index
    %59 = vector.load %arg17[%c0_58, %c0_59] : memref<16x2xf32, #tpu.memory_space<vmem>>, vector<16x2xf32>
    %cst_60 = arith.constant dense<0.000000e+00> : vector<16x64xf32>
    %60 = tpu.matmul %59, %56, %cst_60 {dimension_numbers = #tpu.dot_dimension_numbers<[1], [0], [0], [1], [0, 0, 1, 1], [], []>} : vector<16x2xf32>, vector<2x64xf32>, vector<16x64xf32> -> vector<16x64xf32>
    %c0_61 = arith.constant 0 : index
    %c0_62 = arith.constant 0 : index
    %61 = vector.load %arg22[%c0_61, %c0_62] : memref<16x8xf32, #tpu.memory_space<vmem>>, vector<16x8xf32>
    %c0_63 = arith.constant 0 : index
    %c0_64 = arith.constant 0 : index
    %62 = vector.load %arg23[%c0_63, %c0_64] : memref<16x1xf32, #tpu.memory_space<vmem>>, vector<16x1xf32>
    %c0_65 = arith.constant 0 : index
    %c0_66 = arith.constant 0 : index
    %63 = vector.load %arg21[%c0_65, %c0_66] : memref<16x8xf32, #tpu.memory_space<vmem>>, vector<16x8xf32>
    %64 = vector.broadcast %62 : vector<16x1xf32> to vector<16x8xf32>
    %65 = arith.mulf %64, %63 : vector<16x8xf32>
    %c0_67 = arith.constant 0 : index
    %c0_68 = arith.constant 0 : index
    %66 = vector.load %arg24[%c0_67, %c0_68] : memref<16x1xf32, #tpu.memory_space<vmem>>, vector<16x1xf32>
    %67 = vector.broadcast %66 : vector<16x1xf32> to vector<16x8xf32>
    %68 = arith.mulf %67, %61 : vector<16x8xf32>
    %69 = arith.addf %65, %68 : vector<16x8xf32>
    %c0_69 = arith.constant 0 : index
    %c0_70 = arith.constant 0 : index
    %70 = vector.load %arg26[%c0_69, %c0_70] : memref<8x64xf32, #tpu.memory_space<vmem>>, vector<8x64xf32>
    %cst_71 = arith.constant dense<0.000000e+00> : vector<16x64xf32>
    %71 = tpu.matmul %69, %70, %cst_71 {dimension_numbers = #tpu.dot_dimension_numbers<[1], [0], [0], [1], [0, 0, 1, 1], [], []>} : vector<16x8xf32>, vector<8x64xf32>, vector<16x64xf32> -> vector<16x64xf32>
    %c0_72 = arith.constant 0 : index
    %c0_73 = arith.constant 0 : index
    %72 = vector.load %arg27[%c0_72, %c0_73] : memref<1x64xf32, #tpu.memory_space<vmem>>, vector<1x64xf32>
    %73 = vector.broadcast %72 : vector<1x64xf32> to vector<16x64xf32>
    %74 = arith.addf %71, %73 : vector<16x64xf32>
    %cst_74 = arith.constant 0.000000e+00 : f32
    %75 = vector.broadcast %cst_74 : f32 to vector<16x64xf32>
    %76 = arith.maximumf %74, %75 : vector<16x64xf32>
    %cst_75 = arith.constant 1.000000e+00 : f32
    %77 = vector.broadcast %cst_75 : f32 to vector<16x64xf32>
    %78 = arith.addf %77, %58 : vector<16x64xf32>
    %79 = arith.mulf %76, %78 : vector<16x64xf32>
    %80 = arith.addf %79, %60 : vector<16x64xf32>
    %c0_76 = arith.constant 0 : index
    %c0_77 = arith.constant 0 : index
    %81 = vector.load %arg28[%c0_76, %c0_77] : memref<64x8xf32, #tpu.memory_space<vmem>>, vector<64x8xf32>
    %cst_78 = arith.constant dense<0.000000e+00> : vector<16x8xf32>
    %82 = tpu.matmul %80, %81, %cst_78 {dimension_numbers = #tpu.dot_dimension_numbers<[1], [0], [0], [1], [0, 0, 1, 1], [], []>} : vector<16x64xf32>, vector<64x8xf32>, vector<16x8xf32> -> vector<16x8xf32>
    %c0_79 = arith.constant 0 : index
    %c0_80 = arith.constant 0 : index
    %83 = vector.load %arg29[%c0_79, %c0_80] : memref<1x8xf32, #tpu.memory_space<vmem>>, vector<1x8xf32>
    %84 = vector.broadcast %83 : vector<1x8xf32> to vector<16x8xf32>
    %85 = arith.addf %82, %84 : vector<16x8xf32>
    %86 = arith.subf %85, %61 : vector<16x8xf32>
    %87 = arith.mulf %86, %86 : vector<16x8xf32>
    %c0_81 = arith.constant 0 : index
    %c0_82 = arith.constant 0 : index
    %88 = vector.load %arg25[%c0_81, %c0_82] : memref<16x1xf32, #tpu.memory_space<vmem>>, vector<16x1xf32>
    %89 = vector.broadcast %88 : vector<16x1xf32> to vector<16x8xf32>
    %90 = arith.mulf %87, %89 : vector<16x8xf32>
    %91 = vector.shape_cast %90 : vector<16x8xf32> to vector<1x16x8xf32>
    %cst_83 = arith.constant dense<0.000000e+00> : vector<1xf32>
    %92 = vector.multi_reduction <add>, %91, %cst_83 [1, 2] : vector<1x16x8xf32> to vector<1xf32>
    %93 = vector.shape_cast %92 : vector<1xf32> to vector<1x1x1xf32>
    %94 = vector.extract %93[0, 0, 0] : f32 from vector<1x1x1xf32>
    %cst_84 = arith.constant 7.812500e-03 : f32
    %95 = arith.mulf %94, %cst_84 : f32
    %c0_85 = arith.constant 0 : index
    %c0_86 = arith.constant 0 : index
    %96 = memref.load %arg30[%c0_85, %c0_86] : memref<1x1xf32, #tpu.memory_space<smem>>
    memref.store %95, %arg30[%c0_85, %c0_86] : memref<1x1xf32, #tpu.memory_space<smem>>
    return
  }
}

</mosaic_0001>

<llo_original>
// kernel: train_forward.17
$region0: #{train_forward.17}
  #allocation0 [shape = 'u32[]', space=smem, size = 0x4, offset = 0x4, fixed_abs, tag = 'smem constant byte address 0x4 - core index']
  #allocation1 [shape = 'u32[72,128]{1,0:T(1,128)}', space=vmem, size = 0x9000, scoped, tag = 'internal scratch']
  %s0 = inlined_call_operand.smem [shape: u32[31], index: -1, kind: input, shape index: {}]
  %s1 = sld [smem:[%s0]]
  %s2 = scalar_lea.smem %s0, 1
  %s3 = sld [smem:[%s2]]
  %s4 = scalar_lea.smem %s0, 2
  %s5 = sld [smem:[%s4]]
  %s6 = scalar_lea.smem %s0, 3
  %s7 = sld [smem:[%s6]]
  %s8 = scalar_lea.smem %s0, 4
  %s9 = sld [smem:[%s8]]
  %s10 = scalar_lea.smem %s0, 5
  %s11 = sld [smem:[%s10]]
  %s12 = scalar_lea.smem %s0, 6
  %s13 = sld [smem:[%s12]]
  %s14 = scalar_lea.smem %s0, 7
  %s15 = sld [smem:[%s14]]
  %s16 = scalar_lea.smem %s0, 8
  %s17 = sld [smem:[%s16]]
  %s18 = scalar_lea.smem %s0, 9
  %s19 = sld [smem:[%s18]]
  %s20 = scalar_lea.smem %s0, 10
  %s21 = sld [smem:[%s20]]
  %s22 = scalar_lea.smem %s0, 11
  %s23 = sld [smem:[%s22]]
  %s24 = scalar_lea.smem %s0, 12
  %s25 = sld [smem:[%s24]]
  %s26 = scalar_lea.smem %s0, 13
  %s27 = sld [smem:[%s26]]
  %s28 = scalar_lea.smem %s0, 14
  %s29 = sld [smem:[%s28]]
  %s30 = scalar_lea.smem %s0, 15
  %s31 = sld [smem:[%s30]]
  %s32 = scalar_lea.smem %s0, 16
  %s33 = sld [smem:[%s32]]
  %s34 = scalar_lea.smem %s0, 17
  %s35 = sld [smem:[%s34]]
  %s36 = scalar_lea.smem %s0, 18
  %s37 = sld [smem:[%s36]]
  %s38 = scalar_lea.smem %s0, 19
  %s39 = sld [smem:[%s38]]
  %s40 = scalar_lea.smem %s0, 20
  %s41 = sld [smem:[%s40]]
  %s42 = scalar_lea.smem %s0, 21
  %s43 = sld [smem:[%s42]]
  %s44 = scalar_lea.smem %s0, 22
  %s45 = sld [smem:[%s44]]
  %s46 = scalar_lea.smem %s0, 23
  %s47 = sld [smem:[%s46]]
  %s48 = scalar_lea.smem %s0, 24
  %s49 = sld [smem:[%s48]]
  %s50 = scalar_lea.smem %s0, 25
  %s51 = sld [smem:[%s50]]
  %s52 = scalar_lea.smem %s0, 26
  %s53 = sld [smem:[%s52]]
  %s54 = scalar_lea.smem %s0, 27
  %s55 = sld [smem:[%s54]]
  %s56 = scalar_lea.smem %s0, 28
  %s57 = sld [smem:[%s56]]
  %s58 = scalar_lea.smem %s0, 29
  %s59 = sld [smem:[%s58]]
  %s60 = scalar_lea.smem %s0, 30
  %s61 = sld [smem:[%s60]]
  %s62 = sld [smem:[#allocation0]]
  $region130: #{train_forward.17} parent=0
    _
  %s64 = ssub.s32 1, %s62
  %s65 = scalar_select 0, %s64, %s62
  $region1: #{train_forward.17} parent=0
    #allocation2 [shape = 'u8[512]{0}', space=smem, size = 0x200, scoped, tag = 'output window, operand 0, single buffered']
    #allocation3 [shape = 's32[1]{0}', space=sflag, size = 0x4, scoped, tag = 'scoped memory for train_forward.17']
    %66 = vsyncpa [#allocation3], 0
    // Predicated region
    $region2: #{train_forward.17} parent=1 // pred_check
      _
    $region3: #{train_forward.17} parent=1 // pred_check_branch
      %68 = sbr.rel (0) target = $region5
    $region4: #{train_forward.17} parent=1 // pred_region
      _
    $region5: #{train_forward.17} parent=1 // pred_fallthru
      _
    // Predicated region
    $region6: #{train_forward.17} parent=1 // pred_check
      _
    $region7: #{train_forward.17} parent=1 // pred_check_branch
      %70 = sbr.rel (0) target = $region9
    $region8: #{train_forward.17} parent=1 // pred_region
      _
    $region9: #{train_forward.17} parent=1 // pred_fallthru
      _
    // Predicated region
    $region10: #{train_forward.17} parent=1 // pred_check
      _
    $region11: #{train_forward.17} parent=1 // pred_check_branch
      %72 = sbr.rel (0) target = $region13
    $region12: #{train_forward.17} parent=1 // pred_region
      _
    $region13: #{train_forward.17} parent=1 // pred_fallthru
      _
    // Predicated region
    $region14: #{train_forward.17} parent=1 // pred_check
      _
    $region15: #{train_forward.17} parent=1 // pred_check_branch
      %74 = sbr.rel (0) target = $region17
    $region16: #{train_forward.17} parent=1 // pred_region
      _
    $region17: #{train_forward.17} parent=1 // pred_fallthru
      _
    // Predicated region
    $region18: #{train_forward.17} parent=1 // pred_check
      _
    $region19: #{train_forward.17} parent=1 // pred_check_branch
      %76 = sbr.rel (0) target = $region21
    $region20: #{train_forward.17} parent=1 // pred_region
      _
    $region21: #{train_forward.17} parent=1 // pred_fallthru
      _
    // Predicated region
    $region22: #{train_forward.17} parent=1 // pred_check
      _
    $region23: #{train_forward.17} parent=1 // pred_check_branch
      %78 = sbr.rel (0) target = $region25
    $region24: #{train_forward.17} parent=1 // pred_region
      _
    $region25: #{train_forward.17} parent=1 // pred_fallthru
      _
    // Predicated region
    $region26: #{train_forward.17} parent=1 // pred_check
      _
    $region27: #{train_forward.17} parent=1 // pred_check_branch
      %80 = sbr.rel (0) target = $region29
    $region28: #{train_forward.17} parent=1 // pred_region
      _
    $region29: #{train_forward.17} parent=1 // pred_fallthru
      _
    // Predicated region
    $region30: #{train_forward.17} parent=1 // pred_check
      _
    $region31: #{train_forward.17} parent=1 // pred_check_branch
      %82 = sbr.rel (0) target = $region33
    $region32: #{train_forward.17} parent=1 // pred_region
      _
    $region33: #{train_forward.17} parent=1 // pred_fallthru
      _
    // Predicated region
    $region34: #{train_forward.17} parent=1 // pred_check
      _
    $region35: #{train_forward.17} parent=1 // pred_check_branch
      %84 = sbr.rel (0) target = $region37
    $region36: #{train_forward.17} parent=1 // pred_region
      _
    $region37: #{train_forward.17} parent=1 // pred_fallthru
      _
    // Predicated region
    $region38: #{train_forward.17} parent=1 // pred_check
      _
    $region39: #{train_forward.17} parent=1 // pred_check_branch
      %86 = sbr.rel (0) target = $region41
    $region40: #{train_forward.17} parent=1 // pred_region
      _
    $region41: #{train_forward.17} parent=1 // pred_fallthru
      _
    // Predicated region
    $region42: #{train_forward.17} parent=1 // pred_check
      _
    $region43: #{train_forward.17} parent=1 // pred_check_branch
      %88 = sbr.rel (0) target = $region45
    $region44: #{train_forward.17} parent=1 // pred_region
      _
    $region45: #{train_forward.17} parent=1 // pred_fallthru
      _
    // Predicated region
    $region46: #{train_forward.17} parent=1 // pred_check
      _
    $region47: #{train_forward.17} parent=1 // pred_check_branch
      %90 = sbr.rel (0) target = $region49
    $region48: #{train_forward.17} parent=1 // pred_region
      _
    $region49: #{train_forward.17} parent=1 // pred_fallthru
      _
    // Predicated region
    $region50: #{train_forward.17} parent=1 // pred_check
      _
    $region51: #{train_forward.17} parent=1 // pred_check_branch
      %92 = sbr.rel (0) target = $region53
    $region52: #{train_forward.17} parent=1 // pred_region
      _
    $region53: #{train_forward.17} parent=1 // pred_fallthru
      _
    // Predicated region
    $region54: #{train_forward.17} parent=1 // pred_check
      _
    $region55: #{train_forward.17} parent=1 // pred_check_branch
      %94 = sbr.rel (0) target = $region57
    $region56: #{train_forward.17} parent=1 // pred_region
      _
    $region57: #{train_forward.17} parent=1 // pred_fallthru
      _
    // Predicated region
    $region58: #{train_forward.17} parent=1 // pred_check
      _
    $region59: #{train_forward.17} parent=1 // pred_check_branch
      %96 = sbr.rel (0) target = $region61
    $region60: #{train_forward.17} parent=1 // pred_region
      _
    $region61: #{train_forward.17} parent=1 // pred_fallthru
      _
    // Predicated region
    $region62: #{train_forward.17} parent=1 // pred_check
      _
    $region63: #{train_forward.17} parent=1 // pred_check_branch
      %98 = sbr.rel (0) target = $region65
    $region64: #{train_forward.17} parent=1 // pred_region
      _
    $region65: #{train_forward.17} parent=1 // pred_fallthru
      _
    // Predicated region
    $region66: #{train_forward.17} parent=1 // pred_check
      _
    $region67: #{train_forward.17} parent=1 // pred_check_branch
      %100 = sbr.rel (0) target = $region69
    $region68: #{train_forward.17} parent=1 // pred_region
      _
    $region69: #{train_forward.17} parent=1 // pred_fallthru
      _
    // Predicated region
    $region70: #{train_forward.17} parent=1 // pred_check
      _
    $region71: #{train_forward.17} parent=1 // pred_check_branch
      %102 = sbr.rel (0) target = $region73
    $region72: #{train_forward.17} parent=1 // pred_region
      _
    $region73: #{train_forward.17} parent=1 // pred_fallthru
      _
    // Predicated region
    $region74: #{train_forward.17} parent=1 // pred_check
      _
    $region75: #{train_forward.17} parent=1 // pred_check_branch
      %104 = sbr.rel (0) target = $region77
    $region76: #{train_forward.17} parent=1 // pred_region
      _
    $region77: #{train_forward.17} parent=1 // pred_fallthru
      _
    // Predicated region
    $region78: #{train_forward.17} parent=1 // pred_check
      _
    $region79: #{train_forward.17} parent=1 // pred_check_branch
      %106 = sbr.rel (0) target = $region81
    $region80: #{train_forward.17} parent=1 // pred_region
      _
    $region81: #{train_forward.17} parent=1 // pred_fallthru
      _
    // Predicated region
    $region82: #{train_forward.17} parent=1 // pred_check
      _
    $region83: #{train_forward.17} parent=1 // pred_check_branch
      %108 = sbr.rel (0) target = $region85
    $region84: #{train_forward.17} parent=1 // pred_region
      _
    $region85: #{train_forward.17} parent=1 // pred_fallthru
      _
    // Predicated region
    $region86: #{train_forward.17} parent=1 // pred_check
      _
    $region87: #{train_forward.17} parent=1 // pred_check_branch
      %110 = sbr.rel (0) target = $region89
    $region88: #{train_forward.17} parent=1 // pred_region
      _
    $region89: #{train_forward.17} parent=1 // pred_fallthru
      _
    // Predicated region
    $region90: #{train_forward.17} parent=1 // pred_check
      _
    $region91: #{train_forward.17} parent=1 // pred_check_branch
      %112 = sbr.rel (0) target = $region93
    $region92: #{train_forward.17} parent=1 // pred_region
      _
    $region93: #{train_forward.17} parent=1 // pred_fallthru
      _
    // Predicated region
    $region94: #{train_forward.17} parent=1 // pred_check
      _
    $region95: #{train_forward.17} parent=1 // pred_check_branch
      %114 = sbr.rel (0) target = $region97
    $region96: #{train_forward.17} parent=1 // pred_region
      _
    $region97: #{train_forward.17} parent=1 // pred_fallthru
      _
    // Predicated region
    $region98: #{train_forward.17} parent=1 // pred_check
      _
    $region99: #{train_forward.17} parent=1 // pred_check_branch
      %116 = sbr.rel (0) target = $region101
    $region100: #{train_forward.17} parent=1 // pred_region
      _
    $region101: #{train_forward.17} parent=1 // pred_fallthru
      _
    // Predicated region
    $region102: #{train_forward.17} parent=1 // pred_check
      _
    $region103: #{train_forward.17} parent=1 // pred_check_branch
      %118 = sbr.rel (0) target = $region105
    $region104: #{train_forward.17} parent=1 // pred_region
      _
    $region105: #{train_forward.17} parent=1 // pred_fallthru
      _
    // Predicated region
    $region106: #{train_forward.17} parent=1 // pred_check
      _
    $region107: #{train_forward.17} parent=1 // pred_check_branch
      %120 = sbr.rel (0) target = $region109
    $region108: #{train_forward.17} parent=1 // pred_region
      _
    $region109: #{train_forward.17} parent=1 // pred_fallthru
      _
    // Predicated region
    $region110: #{train_forward.17} parent=1 // pred_check
      _
    $region111: #{train_forward.17} parent=1 // pred_check_branch
      %122 = sbr.rel (0) target = $region113
    $region112: #{train_forward.17} parent=1 // pred_region
      _
    $region113: #{train_forward.17} parent=1 // pred_fallthru
      _
    // Predicated region
    $region114: #{train_forward.17} parent=1 // pred_check
      _
    $region115: #{train_forward.17} parent=1 // pred_check_branch
      %124 = sbr.rel (0) target = $region117
    $region116: #{train_forward.17} parent=1 // pred_region
      _
    $region117: #{train_forward.17} parent=1 // pred_fallthru
      _
    // Predicated region
    $region118: #{train_forward.17} parent=1 // pred_check
      _
    $region119: #{train_forward.17} parent=1 // pred_check_branch
      %126 = sbr.rel (0) target = $region121
    $region120: #{train_forward.17} parent=1 // pred_region
      _
    $region121: #{train_forward.17} parent=1 // pred_fallthru
      _
    %v127 = vld [vmem:[%s1] sm:$0xff]
    %v128 = vld [vmem:[%s1 + $0x8] sm:$0xff]
    %v129 = vld [vmem:[%s1 + $0x10] sm:$0xff]
    %v130 = vld [vmem:[%s1 + $0x18] sm:$0xff]
    %v131 = vld [vmem:[%s1 + $0x20] sm:$0xff]
    %v132 = vld [vmem:[%s1 + $0x28] sm:$0xff]
    %v133 = vld [vmem:[%s1 + $0x30] sm:$0xff]
    %v134 = vld [vmem:[%s1 + $0x38] sm:$0xff]
    %v135 = vld [vmem:[%s1 + $0x40] sm:$0xff]
    %v136 = vld [vmem:[%s1 + $0x48] sm:$0xff]
    %v137 = vld [vmem:[%s1 + $0x50] sm:$0xff]
    %v138 = vld [vmem:[%s1 + $0x58] sm:$0xff]
    %v139 = vld [vmem:[%s1 + $0x60] sm:$0xff]
    %v140 = vld [vmem:[%s1 + $0x68] sm:$0xff]
    %v141 = vld [vmem:[%s1 + $0x70] sm:$0xff]
    %v142 = vld [vmem:[%s1 + $0x78] sm:$0xff]
    %v143 = vld [vmem:[%s1 + $0x80] sm:$0xff]
    %v144 = vld [vmem:[%s1 + $0x88] sm:$0xff]
    %v145 = vld [vmem:[%s1 + $0x90] sm:$0xff]
    %v146 = vld [vmem:[%s1 + $0x98] sm:$0xff]
    %v147 = vld [vmem:[%s1 + $0xa0] sm:$0xff]
    %v148 = vld [vmem:[%s1 + $0xa8] sm:$0xff]
    %v149 = vld [vmem:[%s1 + $0xb0] sm:$0xff]
    %v150 = vld [vmem:[%s1 + $0xb8] sm:$0xff]
    %v151 = vld [vmem:[%s1 + $0xc0] sm:$0xff]
    %v152 = vld [vmem:[%s1 + $0xc8] sm:$0xff]
    %v153 = vld [vmem:[%s1 + $0xd0] sm:$0xff]
    %v154 = vld [vmem:[%s1 + $0xd8] sm:$0xff]
    %v155 = vld [vmem:[%s1 + $0xe0] sm:$0xff]
    %v156 = vld [vmem:[%s1 + $0xe8] sm:$0xff]
    %v157 = vld [vmem:[%s1 + $0xf0] sm:$0xff]
    %v158 = vld [vmem:[%s1 + $0xf8] sm:$0xff]
    %v159 = vld [vmem:[%s5] sm:$0xff]
    %v160 = vld [vmem:[%s5 + $0x8] sm:$0xff]
    %v161 = vld [vmem:[%s5 + $0x10] sm:$0xff]
    %v162 = vld [vmem:[%s5 + $0x18] sm:$0x7]
    %v163 = vld [vmem:[%s7] sm:$0x1]
    %v165 = vperm.slane %v163, 0
    %vm167 = vcmask 220160
    %v169 = vsel %vm167, %v127, 0
    %v172 = vsel %vm167, %v128, 0
    %v175 = vsel %vm167, %v129, 0
    %v178 = vsel %vm167, %v130, 0
    %v181 = vsel %vm167, %v131, 0
    %v184 = vsel %vm167, %v132, 0
    %v187 = vsel %vm167, %v133, 0
    %v190 = vsel %vm167, %v134, 0
    %v193 = vsel %vm167, %v135, 0
    %v196 = vsel %vm167, %v136, 0
    %v199 = vsel %vm167, %v137, 0
    %v202 = vsel %vm167, %v138, 0
    %v205 = vsel %vm167, %v139, 0
    %v208 = vsel %vm167, %v140, 0
    %v211 = vsel %vm167, %v141, 0
    %v214 = vsel %vm167, %v142, 0
    %v217 = vsel %vm167, %v143, 0
    %v220 = vsel %vm167, %v144, 0
    %v223 = vsel %vm167, %v145, 0
    %v226 = vsel %vm167, %v146, 0
    %v229 = vsel %vm167, %v147, 0
    %v232 = vsel %vm167, %v148, 0
    %v235 = vsel %vm167, %v149, 0
    %v238 = vsel %vm167, %v150, 0
    %v241 = vsel %vm167, %v151, 0
    %v244 = vsel %vm167, %v152, 0
    %v247 = vsel %vm167, %v153, 0
    %v250 = vsel %vm167, %v154, 0
    %v253 = vsel %vm167, %v155, 0
    %v256 = vsel %vm167, %v156, 0
    %v259 = vsel %vm167, %v157, 0
    %v262 = vsel %vm167, %v158, 0
    %vm264 = vcmask 1042432
    %v266 = vsel %vm264, %v162, 0
    %268 = vmatpush.msra.mxu0 0.0
    %269 = vmatpush.msra.mxu0 0.0
    %270 = vmatpush.msra.mxu0 0.0
    %271 = vmatpush.msra.mxu0 0.0
    %272 = vmatpush.msra.mxu0 0.0
    %273 = vmatpush.msra.mxu0 0.0
    %274 = vmatpush.msra.mxu0 0.0
    %275 = vmatpush.msra.mxu0 0.0
    %276 = vmatpush.msra.mxu0 0.0
    %277 = vmatpush.msra.mxu0 0.0
    %278 = vmatpush.msra.mxu0 0.0
    %279 = vmatpush.msra.mxu0 0.0
    %280 = vmatpush.msra.mxu0 %v266
    %281 = vmatpush.msra.mxu0 %v161
    %282 = vmatpush.msra.mxu0 %v160
    %283 = vmatpush.msra.mxu0 %v159
    %284 = vmatmul.f32.gmra.mxu0 %v169
    %v285 = vpop.f32.mrf.mxu0
    %v286 = vadd.f32 %v165, %v285
    %287 = vmatmul.f32.gmra.mxu0 %v172
    %v288 = vpop.f32.mrf.mxu0
    %v289 = vadd.f32 %v165, %v288
    %290 = vmatmul.f32.gmra.mxu0 %v175
    %v291 = vpop.f32.mrf.mxu0
    %v292 = vadd.f32 %v165, %v291
    %293 = vmatmul.f32.gmra.mxu0 %v178
    %v294 = vpop.f32.mrf.mxu0
    %v295 = vadd.f32 %v165, %v294
    %296 = vmatmul.f32.gmra.mxu0 %v181
    %v297 = vpop.f32.mrf.mxu0
    %v298 = vadd.f32 %v165, %v297
    %299 = vmatmul.f32.gmra.mxu0 %v184
    %v300 = vpop.f32.mrf.mxu0
    %v301 = vadd.f32 %v165, %v300
    %302 = vmatmul.f32.gmra.mxu0 %v187
    %v303 = vpop.f32.mrf.mxu0
    %v304 = vadd.f32 %v165, %v303
    %305 = vmatmul.f32.gmra.mxu0 %v190
    %v306 = vpop.f32.mrf.mxu0
    %v307 = vadd.f32 %v165, %v306
    %308 = vmatmul.f32.gmra.mxu0 %v193
    %v309 = vpop.f32.mrf.mxu0
    %v310 = vadd.f32 %v165, %v309
    %311 = vmatmul.f32.gmra.mxu0 %v196
    %v312 = vpop.f32.mrf.mxu0
    %v313 = vadd.f32 %v165, %v312
    %314 = vmatmul.f32.gmra.mxu0 %v199
    %v315 = vpop.f32.mrf.mxu0
    %v316 = vadd.f32 %v165, %v315
    %317 = vmatmul.f32.gmra.mxu0 %v202
    %v318 = vpop.f32.mrf.mxu0
    %v319 = vadd.f32 %v165, %v318
    %320 = vmatmul.f32.gmra.mxu0 %v205
    %v321 = vpop.f32.mrf.mxu0
    %v322 = vadd.f32 %v165, %v321
    %323 = vmatmul.f32.gmra.mxu0 %v208
    %v324 = vpop.f32.mrf.mxu0
    %v325 = vadd.f32 %v165, %v324
    %326 = vmatmul.f32.gmra.mxu0 %v211
    %v327 = vpop.f32.mrf.mxu0
    %v328 = vadd.f32 %v165, %v327
    %329 = vmatmul.f32.gmra.mxu0 %v214
    %v330 = vpop.f32.mrf.mxu0
    %v331 = vadd.f32 %v165, %v330
    %332 = vmatmul.f32.gmra.mxu0 %v217
    %v333 = vpop.f32.mrf.mxu0
    %v334 = vadd.f32 %v165, %v333
    %335 = vmatmul.f32.gmra.mxu0 %v220
    %v336 = vpop.f32.mrf.mxu0
    %v337 = vadd.f32 %v165, %v336
    %338 = vmatmul.f32.gmra.mxu0 %v223
    %v339 = vpop.f32.mrf.mxu0
    %v340 = vadd.f32 %v165, %v339
    %341 = vmatmul.f32.gmra.mxu0 %v226
    %v342 = vpop.f32.mrf.mxu0
    %v343 = vadd.f32 %v165, %v342
    %344 = vmatmul.f32.gmra.mxu0 %v229
    %v345 = vpop.f32.mrf.mxu0
    %v346 = vadd.f32 %v165, %v345
    %347 = vmatmul.f32.gmra.mxu0 %v232
    %v348 = vpop.f32.mrf.mxu0
    %v349 = vadd.f32 %v165, %v348
    %350 = vmatmul.f32.gmra.mxu0 %v235
    %v351 = vpop.f32.mrf.mxu0
    %v352 = vadd.f32 %v165, %v351
    %353 = vmatmul.f32.gmra.mxu0 %v238
    %v354 = vpop.f32.mrf.mxu0
    %v355 = vadd.f32 %v165, %v354
    %356 = vmatmul.f32.gmra.mxu0 %v241
    %v357 = vpop.f32.mrf.mxu0
    %v358 = vadd.f32 %v165, %v357
    %359 = vmatmul.f32.gmra.mxu0 %v244
    %v360 = vpop.f32.mrf.mxu0
    %v361 = vadd.f32 %v165, %v360
    %362 = vmatmul.f32.gmra.mxu0 %v247
    %v363 = vpop.f32.mrf.mxu0
    %v364 = vadd.f32 %v165, %v363
    %365 = vmatmul.f32.gmra.mxu0 %v250
    %v366 = vpop.f32.mrf.mxu0
    %v367 = vadd.f32 %v165, %v366
    %368 = vmatmul.f32.gmra.mxu0 %v253
    %v369 = vpop.f32.mrf.mxu0
    %v370 = vadd.f32 %v165, %v369
    %371 = vmatmul.f32.gmra.mxu0 %v256
    %v372 = vpop.f32.mrf.mxu0
    %v373 = vadd.f32 %v165, %v372
    %374 = vmatmul.f32.gmra.mxu0 %v259
    %v375 = vpop.f32.mrf.mxu0
    %v376 = vadd.f32 %v165, %v375
    %377 = vmatmul.f32.gmra.mxu0 %v262
    %v378 = vpop.f32.mrf.mxu0
    %v379 = vadd.f32 %v165, %v378
    %380 = vdwg.mxu0
    %v381 = vmax.f32 %v286, 0.0
    %v382 = vmax.f32 %v289, 0.0
    %v383 = vmax.f32 %v292, 0.0
    %v384 = vmax.f32 %v295, 0.0
    %v385 = vmax.f32 %v298, 0.0
    %v386 = vmax.f32 %v301, 0.0
    %v387 = vmax.f32 %v304, 0.0
    %v388 = vmax.f32 %v307, 0.0
    %v389 = vmax.f32 %v310, 0.0
    %v390 = vmax.f32 %v313, 0.0
    %v391 = vmax.f32 %v316, 0.0
    %v392 = vmax.f32 %v319, 0.0
    %v393 = vmax.f32 %v322, 0.0
    %v394 = vmax.f32 %v325, 0.0
    %v395 = vmax.f32 %v328, 0.0
    %v396 = vmax.f32 %v331, 0.0
    %v397 = vmax.f32 %v334, 0.0
    %v398 = vmax.f32 %v337, 0.0
    %v399 = vmax.f32 %v340, 0.0
    %v400 = vmax.f32 %v343, 0.0
    %v401 = vmax.f32 %v346, 0.0
    %v402 = vmax.f32 %v349, 0.0
    %v403 = vmax.f32 %v352, 0.0
    %v404 = vmax.f32 %v355, 0.0
    %v405 = vmax.f32 %v358, 0.0
    %v406 = vmax.f32 %v361, 0.0
    %v407 = vmax.f32 %v364, 0.0
    %v408 = vmax.f32 %v367, 0.0
    %v409 = vmax.f32 %v370, 0.0
    %v410 = vmax.f32 %v373, 0.0
    %v411 = vmax.f32 %v376, 0.0
    %v412 = vmax.f32 %v379, 0.0
    %v413 = vld [vmem:[%s3] sm:$0xff]
    %415 = vst [vmem:[#allocation1] ss:$2 sm:$0xff] %v413
    %v416 = vld.sshfl [vmem:[#allocation1] sm:$0xff pattern:$0x75316420]
    %v417 = vld.sshfl [vmem:[#allocation1 + $0x8] sm:$0xff pattern:$0x75316420]
    %420 = vmatpush.msra.mxu0 %v396
    %421 = vmatpush.msra.mxu0 %v395
    %422 = vmatpush.msra.mxu0 %v394
    %423 = vmatpush.msra.mxu0 %v393
    %424 = vmatpush.msra.mxu0 %v392
    %425 = vmatpush.msra.mxu0 %v391
    %426 = vmatpush.msra.mxu0 %v390
    %427 = vmatpush.msra.mxu0 %v389
    %428 = vmatpush.msra.mxu0 %v388
    %429 = vmatpush.msra.mxu0 %v387
    %430 = vmatpush.msra.mxu0 %v386
    %431 = vmatpush.msra.mxu0 %v385
    %432 = vmatpush.msra.mxu0 %v384
    %433 = vmatpush.msra.mxu0 %v383
    %434 = vmatpush.msra.mxu0 %v382
    %435 = vmatpush.msra.mxu0 %v381
    %436 = vmatmul.f32.gmra.mxu0 %v416
    %v437 = vpop.f32.mrf.mxu0
    %v438 = vadd.f32 0.0, %v437
    %439 = vdwg.mxu0
    %440 = vmatpush.msra.mxu0 %v412
    %441 = vmatpush.msra.mxu0 %v411
    %442 = vmatpush.msra.mxu0 %v410
    %443 = vmatpush.msra.mxu0 %v409
    %444 = vmatpush.msra.mxu0 %v408
    %445 = vmatpush.msra.mxu0 %v407
    %446 = vmatpush.msra.mxu0 %v406
    %447 = vmatpush.msra.mxu0 %v405
    %448 = vmatpush.msra.mxu0 %v404
    %449 = vmatpush.msra.mxu0 %v403
    %450 = vmatpush.msra.mxu0 %v402
    %451 = vmatpush.msra.mxu0 %v401
    %452 = vmatpush.msra.mxu0 %v400
    %453 = vmatpush.msra.mxu0 %v399
    %454 = vmatpush.msra.mxu0 %v398
    %455 = vmatpush.msra.mxu0 %v397
    %456 = vmatmul.f32.gmra.mxu0 %v417
    %v457 = vpop.f32.mrf.mxu0
    %v458 = vadd.f32 %v438, %v457
    %459 = vdwg.mxu0
    %v460 = vld [vmem:[%s9] sm:$0xff]
    %v461 = vld [vmem:[%s9 + $0x8] sm:$0xff]
    %v462 = vld [vmem:[%s11] sm:$0x1]
    %v464 = vperm.slane %v462, 0
    %vm466 = vcmask 130048
    %v468 = vsel %vm466, %v458, 0
    %470 = vmatpush.msra.mxu0 0.0
    %471 = vmatpush.msra.mxu0 0.0
    %472 = vmatpush.msra.mxu0 0.0
    %473 = vmatpush.msra.mxu0 0.0
    %474 = vmatpush.msra.mxu0 0.0
    %475 = vmatpush.msra.mxu0 0.0
    %476 = vmatpush.msra.mxu0 0.0
    %477 = vmatpush.msra.mxu0 0.0
    %478 = vmatpush.msra.mxu0 0.0
    %479 = vmatpush.msra.mxu0 0.0
    %480 = vmatpush.msra.mxu0 0.0
    %481 = vmatpush.msra.mxu0 0.0
    %482 = vmatpush.msra.mxu0 0.0
    %483 = vmatpush.msra.mxu0 0.0
    %484 = vmatpush.msra.mxu0 %v461
    %485 = vmatpush.msra.mxu0 %v460
    %486 = vmatmul.f32.gmra.mxu0 %v468
    %v487 = vpop.f32.mrf.mxu0
    %v488 = vadd.f32 %v464, %v487
    %489 = vdwg.mxu0
    %v490 = vmax.f32 %v488, 0.0
    %v491 = vld [vmem:[%s13] sm:$0x3]
    %v492 = vld [vmem:[%s15] sm:$0xff]
    %v493 = vld [vmem:[%s17] sm:$0x1]
    %v495 = vperm.slane %v493, 0
    %vm497 = vcmask 64512
    %v499 = vsel %vm497, %v491, 0
    %501 = vmatpush.msra.mxu0 0.0
    %502 = vmatpush.msra.mxu0 0.0
    %503 = vmatpush.msra.mxu0 0.0
    %504 = vmatpush.msra.mxu0 0.0
    %505 = vmatpush.msra.mxu0 0.0
    %506 = vmatpush.msra.mxu0 0.0
    %507 = vmatpush.msra.mxu0 0.0
    %508 = vmatpush.msra.mxu0 0.0
    %509 = vmatpush.msra.mxu0 0.0
    %510 = vmatpush.msra.mxu0 0.0
    %511 = vmatpush.msra.mxu0 0.0
    %512 = vmatpush.msra.mxu0 0.0
    %513 = vmatpush.msra.mxu0 0.0
    %514 = vmatpush.msra.mxu0 0.0
    %515 = vmatpush.msra.mxu0 0.0
    %516 = vmatpush.msra.mxu0 %v492
    %517 = vmatmul.f32.gmra.mxu0 %v499
    %v518 = vpop.f32.mrf.mxu0
    %v519 = vadd.f32 %v495, %v518
    %520 = vdwg.mxu0
    %v521 = vmax.f32 %v519, 0.0
    %v522 = vld [vmem:[%s19] sm:$0xff]
    %v523 = vld [vmem:[%s19 + $0x8] sm:$0xff]
    %v524 = vld [vmem:[%s19 + $0x10] sm:$0xff]
    %v525 = vld [vmem:[%s19 + $0x18] sm:$0xff]
    %v526 = vld [vmem:[%s21] sm:$0xff]
    %v527 = vld [vmem:[%s21 + $0x8] sm:$0xff]
    %v528 = vld [vmem:[%s21 + $0x10] sm:$0xff]
    %v529 = vld [vmem:[%s21 + $0x18] sm:$0xff]
    %v531 = vrot.slane %v490, 2
    %vm532 = vcmask 261120
    %v533 = vsel %vm532, %v531, 0
    %535 = vmatpush.msra.mxu0 0.0
    %536 = vmatpush.msra.mxu0 0.0
    %537 = vmatpush.msra.mxu0 0.0
    %538 = vmatpush.msra.mxu0 0.0
    %539 = vmatpush.msra.mxu0 0.0
    %540 = vmatpush.msra.mxu0 0.0
    %541 = vmatpush.msra.mxu0 0.0
    %542 = vmatpush.msra.mxu0 0.0
    %543 = vmatpush.msra.mxu0 0.0
    %544 = vmatpush.msra.mxu0 0.0
    %545 = vmatpush.msra.mxu0 0.0
    %546 = vmatpush.msra.mxu0 0.0
    %547 = vmatpush.msra.mxu0 %v529
    %548 = vmatpush.msra.mxu0 %v528
    %549 = vmatpush.msra.mxu0 %v527
    %550 = vmatpush.msra.mxu0 %v526
    %551 = vmatmul.f32.gmra.mxu0 %v533
    %v552 = vpop.f32.mrf.mxu0
    %v553 = vadd.f32 0.0, %v552
    %554 = vdwg.mxu0
    %v555 = vsel %vm532, %v490, 0
    %557 = vmatpush.msra.mxu0 0.0
    %558 = vmatpush.msra.mxu0 0.0
    %559 = vmatpush.msra.mxu0 0.0
    %560 = vmatpush.msra.mxu0 0.0
    %561 = vmatpush.msra.mxu0 0.0
    %562 = vmatpush.msra.mxu0 0.0
    %563 = vmatpush.msra.mxu0 0.0
    %564 = vmatpush.msra.mxu0 0.0
    %565 = vmatpush.msra.mxu0 0.0
    %566 = vmatpush.msra.mxu0 0.0
    %567 = vmatpush.msra.mxu0 0.0
    %568 = vmatpush.msra.mxu0 0.0
    %569 = vmatpush.msra.mxu0 %v525
    %570 = vmatpush.msra.mxu0 %v524
    %571 = vmatpush.msra.mxu0 %v523
    %572 = vmatpush.msra.mxu0 %v522
    %573 = vmatmul.f32.gmra.mxu0 %v555
    %v574 = vpop.f32.mrf.mxu0
    %v575 = vadd.f32 %v553, %v574
    %576 = vdwg.mxu0
    %v577 = vld [vmem:[%s23] sm:$0xff]
    %v578 = vld [vmem:[%s23 + $0x8] sm:$0xff]
    %v579 = vld [vmem:[%s23 + $0x10] sm:$0xff]
    %v580 = vld [vmem:[%s23 + $0x18] sm:$0xff]
    %v582 = vsel %vm532, %v521, 0
    %584 = vmatpush.msra.mxu0 0.0
    %585 = vmatpush.msra.mxu0 0.0
    %586 = vmatpush.msra.mxu0 0.0
    %587 = vmatpush.msra.mxu0 0.0
    %588 = vmatpush.msra.mxu0 0.0
    %589 = vmatpush.msra.mxu0 0.0
    %590 = vmatpush.msra.mxu0 0.0
    %591 = vmatpush.msra.mxu0 0.0
    %592 = vmatpush.msra.mxu0 0.0
    %593 = vmatpush.msra.mxu0 0.0
    %594 = vmatpush.msra.mxu0 0.0
    %595 = vmatpush.msra.mxu0 0.0
    %596 = vmatpush.msra.mxu0 %v580
    %597 = vmatpush.msra.mxu0 %v579
    %598 = vmatpush.msra.mxu0 %v578
    %599 = vmatpush.msra.mxu0 %v577
    %600 = vmatmul.f32.gmra.mxu0 %v582
    %v601 = vpop.f32.mrf.mxu0
    %v602 = vadd.f32 0.0, %v601
    %603 = vdwg.mxu0
    %v604 = vadd.f32 %v575, %v602
    %v605 = vld [vmem:[%s25] sm:$0x1]
    %v607 = vperm.slane %v605, 0
    %v609 = vadd.f32 %v604, %v607
    %v610 = vld [vmem:[%s27] sm:$0xff]
    %v611 = vld [vmem:[%s27 + $0x8] sm:$0xff]
    %v612 = vld [vmem:[%s27 + $0x10] sm:$0xff]
    %v613 = vld [vmem:[%s27 + $0x18] sm:$0xff]
    %v614 = vld [vmem:[%s29] sm:$0xff]
    %v615 = vld [vmem:[%s29 + $0x8] sm:$0xff]
    %v616 = vld [vmem:[%s29 + $0x10] sm:$0xff]
    %v617 = vld [vmem:[%s29 + $0x18] sm:$0xff]
    %618 = vmatpush.msra.mxu0 0.0
    %619 = vmatpush.msra.mxu0 0.0
    %620 = vmatpush.msra.mxu0 0.0
    %621 = vmatpush.msra.mxu0 0.0
    %622 = vmatpush.msra.mxu0 0.0
    %623 = vmatpush.msra.mxu0 0.0
    %624 = vmatpush.msra.mxu0 0.0
    %625 = vmatpush.msra.mxu0 0.0
    %626 = vmatpush.msra.mxu0 0.0
    %627 = vmatpush.msra.mxu0 0.0
    %628 = vmatpush.msra.mxu0 0.0
    %629 = vmatpush.msra.mxu0 0.0
    %630 = vmatpush.msra.mxu0 %v617
    %631 = vmatpush.msra.mxu0 %v616
    %632 = vmatpush.msra.mxu0 %v615
    %633 = vmatpush.msra.mxu0 %v614
    %634 = vmatmul.f32.gmra.mxu0 %v533
    %v635 = vpop.f32.mrf.mxu0
    %v636 = vadd.f32 0.0, %v635
    %637 = vdwg.mxu0
    %638 = vmatpush.msra.mxu0 0.0
    %639 = vmatpush.msra.mxu0 0.0
    %640 = vmatpush.msra.mxu0 0.0
    %641 = vmatpush.msra.mxu0 0.0
    %642 = vmatpush.msra.mxu0 0.0
    %643 = vmatpush.msra.mxu0 0.0
    %644 = vmatpush.msra.mxu0 0.0
    %645 = vmatpush.msra.mxu0 0.0
    %646 = vmatpush.msra.mxu0 0.0
    %647 = vmatpush.msra.mxu0 0.0
    %648 = vmatpush.msra.mxu0 0.0
    %649 = vmatpush.msra.mxu0 0.0
    %650 = vmatpush.msra.mxu0 %v613
    %651 = vmatpush.msra.mxu0 %v612
    %652 = vmatpush.msra.mxu0 %v611
    %653 = vmatpush.msra.mxu0 %v610
    %654 = vmatmul.f32.gmra.mxu0 %v555
    %v655 = vpop.f32.mrf.mxu0
    %v656 = vadd.f32 %v636, %v655
    %657 = vdwg.mxu0
    %v658 = vld [vmem:[%s31] sm:$0xff]
    %v659 = vld [vmem:[%s31 + $0x8] sm:$0xff]
    %v660 = vld [vmem:[%s31 + $0x10] sm:$0xff]
    %v661 = vld [vmem:[%s31 + $0x18] sm:$0xff]
    %662 = vmatpush.msra.mxu0 0.0
    %663 = vmatpush.msra.mxu0 0.0
    %664 = vmatpush.msra.mxu0 0.0
    %665 = vmatpush.msra.mxu0 0.0
    %666 = vmatpush.msra.mxu0 0.0
    %667 = vmatpush.msra.mxu0 0.0
    %668 = vmatpush.msra.mxu0 0.0
    %669 = vmatpush.msra.mxu0 0.0
    %670 = vmatpush.msra.mxu0 0.0
    %671 = vmatpush.msra.mxu0 0.0
    %672 = vmatpush.msra.mxu0 0.0
    %673 = vmatpush.msra.mxu0 0.0
    %674 = vmatpush.msra.mxu0 %v661
    %675 = vmatpush.msra.mxu0 %v660
    %676 = vmatpush.msra.mxu0 %v659
    %677 = vmatpush.msra.mxu0 %v658
    %678 = vmatmul.f32.gmra.mxu0 %v582
    %v679 = vpop.f32.mrf.mxu0
    %v680 = vadd.f32 0.0, %v679
    %681 = vdwg.mxu0
    %v682 = vadd.f32 %v656, %v680
    %v683 = vld [vmem:[%s33] sm:$0x1]
    %v685 = vperm.slane %v683, 0
    %v687 = vadd.f32 %v682, %v685
    %v688 = vld [vmem:[%s37] sm:$0x3]
    %v689 = vld [vmem:[%s39] sm:$0xff]
    %v690 = vld [vmem:[%s39 + $0x8] sm:$0xff]
    %v692 = vsel %vm466, %v688, 0
    %694 = vmatpush.msra.mxu0 0.0
    %695 = vmatpush.msra.mxu0 0.0
    %696 = vmatpush.msra.mxu0 0.0
    %697 = vmatpush.msra.mxu0 0.0
    %698 = vmatpush.msra.mxu0 0.0
    %699 = vmatpush.msra.mxu0 0.0
    %700 = vmatpush.msra.mxu0 0.0
    %701 = vmatpush.msra.mxu0 0.0
    %702 = vmatpush.msra.mxu0 0.0
    %703 = vmatpush.msra.mxu0 0.0
    %704 = vmatpush.msra.mxu0 0.0
    %705 = vmatpush.msra.mxu0 0.0
    %706 = vmatpush.msra.mxu0 0.0
    %707 = vmatpush.msra.mxu0 0.0
    %708 = vmatpush.msra.mxu0 %v690
    %709 = vmatpush.msra.mxu0 %v689
    %710 = vmatmul.f32.gmra.mxu0 %v692
    %v711 = vpop.f32.mrf.mxu0
    %v712 = vadd.f32 0.0, %v711
    %713 = vdwg.mxu0
    %v714 = vadd.f32 %v609, %v712
    %v715 = vld [vmem:[%s41] sm:$0xff]
    %v716 = vld [vmem:[%s41 + $0x8] sm:$0xff]
    %717 = vmatpush.msra.mxu0 0.0
    %718 = vmatpush.msra.mxu0 0.0
    %719 = vmatpush.msra.mxu0 0.0
    %720 = vmatpush.msra.mxu0 0.0
    %721 = vmatpush.msra.mxu0 0.0
    %722 = vmatpush.msra.mxu0 0.0
    %723 = vmatpush.msra.mxu0 0.0
    %724 = vmatpush.msra.mxu0 0.0
    %725 = vmatpush.msra.mxu0 0.0
    %726 = vmatpush.msra.mxu0 0.0
    %727 = vmatpush.msra.mxu0 0.0
    %728 = vmatpush.msra.mxu0 0.0
    %729 = vmatpush.msra.mxu0 0.0
    %730 = vmatpush.msra.mxu0 0.0
    %731 = vmatpush.msra.mxu0 %v716
    %732 = vmatpush.msra.mxu0 %v715
    %733 = vmatmul.f32.gmra.mxu0 %v692
    %v734 = vpop.f32.mrf.mxu0
    %v735 = vadd.f32 0.0, %v734
    %736 = vdwg.mxu0
    %v737 = vadd.f32 %v687, %v735
    %v738 = vld [vmem:[%s35] sm:$0xff]
    %v739 = vld [vmem:[%s35 + $0x8] sm:$0xff]
    %vm740 = vcmask 15360
    %v742 = vsel %vm740, %v738, 0
    %v745 = vsel %vm740, %v739, 0
    %vm747 = vcmask 1041408
    %v749 = vsel %vm747, %v737, 0
    %751 = vmatpush.msra.mxu0 0.0
    %752 = vmatpush.msra.mxu0 0.0
    %753 = vmatpush.msra.mxu0 0.0
    %754 = vmatpush.msra.mxu0 0.0
    %755 = vmatpush.msra.mxu0 0.0
    %756 = vmatpush.msra.mxu0 0.0
    %757 = vmatpush.msra.mxu0 0.0
    %758 = vmatpush.msra.mxu0 0.0
    %759 = vmatpush.msra.mxu0 0.0
    %760 = vmatpush.msra.mxu0 0.0
    %761 = vmatpush.msra.mxu0 0.0
    %762 = vmatpush.msra.mxu0 0.0
    %763 = vmatpush.msra.mxu0 0.0
    %764 = vmatpush.msra.mxu0 0.0
    %765 = vmatpush.msra.mxu0 0.0
    %766 = vmatpush.msra.mxu0 %v749
    %767 = vmatmul.f32.gmra.mxu0 %v742
    %v768 = vpop.f32.mrf.mxu0
    %v769 = vadd.f32 0.0, %v768
    %770 = vmatmul.f32.gmra.mxu0 %v745
    %v771 = vpop.f32.mrf.mxu0
    %v772 = vadd.f32 0.0, %v771
    %773 = vdwg.mxu0
    %v774 = vld [vmem:[%s45] sm:$0xff]
    %v775 = vld [vmem:[%s45 + $0x8] sm:$0xff]
    %v776 = vld [vmem:[%s47] sm:$0xff]
    %v777 = vld [vmem:[%s47 + $0x8] sm:$0xff]
    %v778 = vld [vmem:[%s43] sm:$0xff]
    %v779 = vld [vmem:[%s43 + $0x8] sm:$0xff]
    %781 = vset.pattern.permute.xlu0 0
    %782 = vperm.xlu0 %781, %v776
    %v783 = vpop.permute.xlu0 %782
    %786 = vset.pattern.permute.xlu0 0
    %787 = vperm.xlu0 %786, %v777
    %v788 = vpop.permute.xlu0 %787
    %v790 = vmul.f32 %v783, %v778
    %v791 = vmul.f32 %v788, %v779
    %v792 = vld [vmem:[%s49] sm:$0xff]
    %v793 = vld [vmem:[%s49 + $0x8] sm:$0xff]
    %795 = vset.pattern.permute.xlu0 0
    %796 = vperm.xlu0 %795, %v792
    %v797 = vpop.permute.xlu0 %796
    %800 = vset.pattern.permute.xlu0 0
    %801 = vperm.xlu0 %800, %v793
    %v802 = vpop.permute.xlu0 %801
    %v804 = vmul.f32 %v797, %v774
    %v805 = vmul.f32 %v802, %v775
    %v806 = vadd.f32 %v790, %v804
    %v807 = vadd.f32 %v791, %v805
    %v808 = vld [vmem:[%s53] sm:$0xff]
    %v809 = vld [vmem:[%s55] sm:$0x1]
    %v811 = vperm.slane %v809, 0
    %v814 = vsel %vm497, %v806, 0
    %v817 = vsel %vm497, %v807, 0
    %819 = vmatpush.msra.mxu0 0.0
    %820 = vmatpush.msra.mxu0 0.0
    %821 = vmatpush.msra.mxu0 0.0
    %822 = vmatpush.msra.mxu0 0.0
    %823 = vmatpush.msra.mxu0 0.0
    %824 = vmatpush.msra.mxu0 0.0
    %825 = vmatpush.msra.mxu0 0.0
    %826 = vmatpush.msra.mxu0 0.0
    %827 = vmatpush.msra.mxu0 0.0
    %828 = vmatpush.msra.mxu0 0.0
    %829 = vmatpush.msra.mxu0 0.0
    %830 = vmatpush.msra.mxu0 0.0
    %831 = vmatpush.msra.mxu0 0.0
    %832 = vmatpush.msra.mxu0 0.0
    %833 = vmatpush.msra.mxu0 0.0
    %834 = vmatpush.msra.mxu0 %v808
    %835 = vmatmul.f32.gmra.mxu0 %v814
    %v836 = vpop.f32.mrf.mxu0
    %v837 = vadd.f32 %v811, %v836
    %838 = vmatmul.f32.gmra.mxu0 %v817
    %v839 = vpop.f32.mrf.mxu0
    %v840 = vadd.f32 %v811, %v839
    %841 = vdwg.mxu0
    %v842 = vmax.f32 %v837, 0.0
    %v843 = vmax.f32 %v840, 0.0
    %v845 = vsel %vm747, %v714, 0
    %847 = vmatpush.msra.mxu0 0.0
    %848 = vmatpush.msra.mxu0 0.0
    %849 = vmatpush.msra.mxu0 0.0
    %850 = vmatpush.msra.mxu0 0.0
    %851 = vmatpush.msra.mxu0 0.0
    %852 = vmatpush.msra.mxu0 0.0
    %853 = vmatpush.msra.mxu0 0.0
    %854 = vmatpush.msra.mxu0 0.0
    %855 = vmatpush.msra.mxu0 0.0
    %856 = vmatpush.msra.mxu0 0.0
    %857 = vmatpush.msra.mxu0 0.0
    %858 = vmatpush.msra.mxu0 0.0
    %859 = vmatpush.msra.mxu0 0.0
    %860 = vmatpush.msra.mxu0 0.0
    %861 = vmatpush.msra.mxu0 0.0
    %862 = vmatpush.msra.mxu0 %v845
    %863 = vmatmul.f32.gmra.mxu0 %v742
    %v864 = vpop.f32.mrf.mxu0
    %v865 = vadd.f32 1.0, %v864
    %866 = vmatmul.f32.gmra.mxu0 %v745
    %v867 = vpop.f32.mrf.mxu0
    %v868 = vadd.f32 1.0, %v867
    %869 = vdwg.mxu0
    %v870 = vmul.f32 %v842, %v865
    %v871 = vmul.f32 %v843, %v868
    %v872 = vadd.f32 %v870, %v769
    %v873 = vadd.f32 %v871, %v772
    %v874 = vld [vmem:[%s57] sm:$0xff]
    %v875 = vld [vmem:[%s57 + $0x8] sm:$0xff]
    %v876 = vld [vmem:[%s57 + $0x10] sm:$0xff]
    %v877 = vld [vmem:[%s57 + $0x18] sm:$0xff]
    %v878 = vld [vmem:[%s57 + $0x20] sm:$0xff]
    %v879 = vld [vmem:[%s57 + $0x28] sm:$0xff]
    %v880 = vld [vmem:[%s57 + $0x30] sm:$0xff]
    %v881 = vld [vmem:[%s57 + $0x38] sm:$0xff]
    %v882 = vld [vmem:[%s59] sm:$0x1]
    %v884 = vperm.slane %v882, 0
    %vm886 = vcmask 523264
    %v888 = vsel %vm886, %v872, 0
    %v891 = vsel %vm886, %v873, 0
    %893 = vmatpush.msra.mxu0 0.0
    %894 = vmatpush.msra.mxu0 0.0
    %895 = vmatpush.msra.mxu0 0.0
    %896 = vmatpush.msra.mxu0 0.0
    %897 = vmatpush.msra.mxu0 0.0
    %898 = vmatpush.msra.mxu0 0.0
    %899 = vmatpush.msra.mxu0 0.0
    %900 = vmatpush.msra.mxu0 0.0
    %901 = vmatpush.msra.mxu0 %v881
    %902 = vmatpush.msra.mxu0 %v880
    %903 = vmatpush.msra.mxu0 %v879
    %904 = vmatpush.msra.mxu0 %v878
    %905 = vmatpush.msra.mxu0 %v877
    %906 = vmatpush.msra.mxu0 %v876
    %907 = vmatpush.msra.mxu0 %v875
    %908 = vmatpush.msra.mxu0 %v874
    %909 = vmatmul.f32.gmra.mxu0 %v888
    %v910 = vpop.f32.mrf.mxu0
    %v911 = vadd.f32 %v884, %v910
    %912 = vmatmul.f32.gmra.mxu0 %v891
    %v913 = vpop.f32.mrf.mxu0
    %v914 = vadd.f32 %v884, %v913
    %915 = vdwg.mxu0
    %v916 = vsub.f32 %v911, %v774
    %v917 = vsub.f32 %v914, %v775
    %v918 = vmul.f32 %v916, %v916
    %v919 = vmul.f32 %v917, %v917
    %v920 = vld [vmem:[%s51] sm:$0xff]
    %v921 = vld [vmem:[%s51 + $0x8] sm:$0xff]
    %923 = vset.pattern.permute.xlu0 0
    %924 = vperm.xlu0 %923, %v920
    %v925 = vpop.permute.xlu0 %924
    %928 = vset.pattern.permute.xlu0 0
    %929 = vperm.xlu0 %928, %v921
    %v930 = vpop.permute.xlu0 %929
    %v932 = vmul.f32 %v918, %v925
    %v933 = vmul.f32 %v919, %v930
    %v934 = vsel %vm497, %v932, 0.0
    %v935 = vsel %vm497, %v933, 0.0
    %v936 = vadd.f32 %v934, %v935
    %937 = vadd.xlane.f32.xlu0 %v936
    %v938 = vpop.xlane.xlu0 %937
    %v939 = vrot.slane %v938, 4
    %v940 = vadd.f32 %v938, %v939
    %v941 = vrot.slane %v940, 2
    %v942 = vadd.f32 %v940, %v941
    %v943 = vrot.slane %v942, 1
    %v944 = vadd.f32 %v942, %v943
    %s945 = vtos %v944
    %s946 = smul.f32 %s945, 0.0078125
    %s947 = scalar_lea.smem [#allocation2], 0
    %948 = sst [smem:[%s947]] %s946
    // Predicated region
    $region122: #{train_forward.17} parent=1 // pred_check
      _
    $region123: #{train_forward.17} parent=1 // pred_check_branch
      %950 = sbr.rel (0) target = $region125
    $region124: #{train_forward.17} parent=1 // pred_region
      %952 = vsyncadd [#allocation3], 0
      %s954 = sshll.u32 %s61, 4
      %s955 = int_to_ptr.hbm [resolvable:$true] %s954
      %957 = dma.smem_to_hbm [#allocation2], 16, %s955, [#allocation3]
    $region125: #{train_forward.17} parent=1 // pred_fallthru
      _
    // Predicated region
    $region126: #{train_forward.17} parent=1 // pred_check
      _
    $region127: #{train_forward.17} parent=1 // pred_check_branch
      %959 = sbr.rel (0) target = $region129
    $region128: #{train_forward.17} parent=1 // pred_region
      %961 = dma.done [#allocation3], 16
    $region129: #{train_forward.17} parent=1 // pred_fallthru
      _
    %962 = sfence
    %963 = vsyncpa [#allocation3], 1

</llo_original>
